<compile_context>
chip_gen: v7x
topology: tpu7x:2x2x1
jax: 0.10.0
libtpu: 0.0.40
codegen_flags: <defaults>
</compile_context>

<pallas_src>
import jax
import jax.numpy as jnp
from jax.experimental import pallas as pl
from jax.experimental.pallas import tpu as pltpu


# --------------------------------------------------------------------------
# Reduction planning: lane-dense layout + core split + row tiling.
# --------------------------------------------------------------------------

_LANE = 128            # vreg lane width
_SUBLANE = 8           # f32 sublanes per vreg
_MAX_TILE_ROWS = 1024  # 1024 x 128 x 4B = 512 KiB per input block (v7x-safe)
_N_SPLITS = 2          # leading "parallel" grid axis (v7x has 2 TensorCores)


def _cdiv(a, b):
    return -(-a // b)


def _plan(n):
    """Static tiling plan for reducing n elements.

    Returns (rows, splits, blocks_per_split, tile_rows), with
    rows = splits * blocks_per_split * tile_rows and tile_rows % 8 == 0.
    """
    rows_needed = _cdiv(n, _LANE)
    splits = _N_SPLITS if rows_needed >= _N_SPLITS * _SUBLANE else 1
    per_split = _cdiv(rows_needed, splits)
    per_split = _cdiv(per_split, _SUBLANE) * _SUBLANE      # sublane align
    if per_split > _MAX_TILE_ROWS:
        tile = _MAX_TILE_ROWS
        per_split = _cdiv(per_split, tile) * tile
    else:
        tile = per_split
    rows = splits * per_split
    return rows, splits, per_split // tile, tile


def _flatten_lane_dense(x, rows):
    """Flatten x to a zero-padded (rows, 128) slab.

    Zero padding is harmless: every statistic we accumulate (|a-b|, x, x^2)
    is zero on padded elements; means divide by the true element count."""
    flat = x.reshape(-1)
    pad = rows * _LANE - flat.shape[0]
    if pad:
        flat = jnp.pad(flat, (0, pad))
    return flat.reshape(rows, _LANE)


# --------------------------------------------------------------------------
# Generic tiled sum-reduction Pallas kernel.
# --------------------------------------------------------------------------

def _make_reduction_kernel(n_in, n_stats, stat_fn):
    """Build a tiled sum-reduction kernel.

    stat_fn(*f32_tiles) -> tuple of n_stats tile-shaped arrays whose global
    sums are wanted.  Steady state: pure VPU adds into a tile-shaped VMEM
    accumulator.  Epilogue (last grid step only): sublane reduce to an
    (8, 128) lane-dense slab per statistic.
    """

    def kernel(*refs):
        in_refs = refs[:n_in]
        o_ref = refs[n_in]          # block (1, n_stats, 8, 128)
        acc_ref = refs[n_in + 1]    # VMEM scratch (n_stats, tile, 128)
        j = pl.program_id(1)

        @pl.when(j == 0)
        def _():
            acc_ref[...] = jnp.zeros_like(acc_ref)

        vals = [r[...].astype(jnp.float32) for r in in_refs]
        stats = stat_fn(*vals)
        for k in range(n_stats):
            acc_ref[k] += stats[k]

        @pl.when(j == pl.num_programs(1) - 1)
        def _():
            for k in range(n_stats):
                part = acc_ref[k].reshape(-1, _SUBLANE, _LANE)
                o_ref[0, k] = jnp.sum(part, axis=0)        # (8, 128)

    return kernel


def _reduce_stats(stat_fn, n_stats, *arrays):
    """Sum the statistics produced by stat_fn over all elements of `arrays`
    (all arrays have identical shape).  Returns (sums[n_stats], n_elements)."""
    n = int(arrays[0].size)
    rows, splits, bps, tile = _plan(n)
    flats = [_flatten_lane_dense(a, rows) for a in arrays]

    in_spec = pl.BlockSpec((tile, _LANE),
                           lambda c, j, bps=bps: (c * bps + j, 0))
    bytes_in = sum(int(a.size) * int(a.dtype.itemsize) for a in arrays)
    out = pl.pallas_call(
        _make_reduction_kernel(len(arrays), n_stats, stat_fn),
        out_shape=jax.ShapeDtypeStruct((splits, n_stats, _SUBLANE, _LANE),
                                       jnp.float32),
        grid_spec=pltpu.PrefetchScalarGridSpec(
            num_scalar_prefetch=0,
            grid=(splits, bps),
            in_specs=[in_spec] * len(arrays),
            out_specs=pl.BlockSpec((1, n_stats, _SUBLANE, _LANE),
                                   lambda c, j: (c, 0, 0, 0)),
            scratch_shapes=[pltpu.VMEM((n_stats, tile, _LANE), jnp.float32)]),
        compiler_params=pltpu.CompilerParams(
            dimension_semantics=("parallel", "arbitrary")),
        cost_estimate=pl.CostEstimate(
            flops=3 * n * max(n_stats, len(arrays)),
            transcendentals=0,
            bytes_accessed=bytes_in + splits * n_stats * _SUBLANE * _LANE * 4),
    )(*flats)
    # Tiny cross-core / cross-lane finish in plain JAX.
    return jnp.sum(out, axis=(0, 2, 3)), n


# -------------------------- statistic definitions --------------------------

def _abs_diff_stats(a, b):
    return (jnp.abs(a - b),)


def _moment_stats(x):
    return (x, x * x)


def _pair_stats(r, f):
    # Fused last-layer pass: FM numerator + both prediction moments.
    return (jnp.abs(r - f), r, r * r, f, f * f)


# ------------------------------ loss wrappers ------------------------------

def l1_loss(a, b):
    """F.l1_loss(a, b), reduction='mean'."""
    sums, n = _reduce_stats(_abs_diff_stats, 1, a, b)
    return sums[0] / n


def mse_to_const(x, target):
    """F.mse_loss(x, target * ones_like(x)), reduction='mean'.

    Single pass over x: mean((x-t)^2) = mean(x^2) - 2 t mean(x) + t^2."""
    sums, n = _reduce_stats(_moment_stats, 2, x)
    mx, mx2 = sums[0] / n, sums[1] / n
    t = float(target)
    return mx2 - 2.0 * t * mx + t * t


def fused_last_layer_means(real_pred, fake_pred):
    """One pass over the (real, fake) patch-prediction pair.

    Returns means (|r-f|, r, r^2, f, f^2) as a length-5 array."""
    sums, n = _reduce_stats(_pair_stats, 5, real_pred, fake_pred)
    return sums / n


# ---------------------- synthetic generator/discriminator ----------------------

def _conv1x1(x, w):  # x: (N, C, H, W), w: (O, C) -> (N, O, H, W)
    return jnp.einsum("nchw,oc->nohw", x, w)


def _leaky_relu(x, slope=0.2):
    return jnp.where(x >= 0, x, slope * x)


def _avg_pool2(x):
    n, c, h, w = x.shape
    return x.reshape(n, c, h // 2, 2, w // 2, 2).mean(axis=(3, 5))


class SyntheticGenerator:
    """Deterministic stand-in generator: 1x1 conv + tanh."""

    def __init__(self, key, in_ch, out_ch):
        self.w = 0.1 * jax.random.normal(key, (out_ch, in_ch), jnp.float32)

    def __call__(self, x):
        return jnp.tanh(_conv1x1(x, self.w))


class SyntheticMultiscaleDiscriminator:
    """Pix2PixHD-style multiscale PatchGAN stand-in.

    discriminator(y) -> nested list: [per-discriminator][per-layer features],
    last element of each inner list is the patch prediction.
    """

    def __init__(self, key, in_ch, n_discriminators=2, hidden=8):
        self.n_discriminators = n_discriminators
        self.module = self  # mimic nn.DataParallel(...).module access
        keys = jax.random.split(key, 3 * n_discriminators)
        self.params = []
        for d in range(n_discriminators):
            k0, k1, k2 = keys[3 * d:3 * d + 3]
            self.params.append((
                0.1 * jax.random.normal(k0, (hidden, in_ch), jnp.float32),
                0.1 * jax.random.normal(k1, (hidden, hidden), jnp.float32),
                0.1 * jax.random.normal(k2, (1, hidden), jnp.float32),
            ))

    def __call__(self, y):
        preds = []
        x = y
        for d in range(self.n_discriminators):
            w0, w1, w2 = self.params[d]
            f0 = _leaky_relu(_conv1x1(x, w0))
            f1 = _leaky_relu(_conv1x1(f0, w1))
            f2 = _conv1x1(f1, w2)          # patch prediction (last feature)
            preds.append([f0, f1, f2])
            x = _avg_pool2(x)              # next discriminator sees half res
        return preds


# ------------------------------ the loss module ------------------------------

class Pix2PixHDLoss:
    def __init__(self, device=None, lambda1=10.0, lambda2=10.0,
                 norm_weight_to_one=True):
        lambda0 = 1.0
        scale = max(lambda0, lambda1, lambda2) if norm_weight_to_one else 1.0
        self.device = device
        self.lambda0 = lambda0 / scale
        self.lambda1 = lambda1 / scale
        self.lambda2 = lambda2 / scale

    # Standalone methods (API parity with the PyTorch module).
    def adv_loss(self, discriminator_preds, is_real):
        target = 1.0 if is_real else 0.0
        total = jnp.float32(0.0)
        for preds in discriminator_preds:
            total = total + mse_to_const(preds[-1], target)
        return total

    def fm_loss(self, real_preds, fake_preds):
        total = jnp.float32(0.0)
        for real_features, fake_features in zip(real_preds, fake_preds):
            for rf, ff in zip(real_features, fake_features):
                total = total + l1_loss(jax.lax.stop_gradient(rf), ff)
        return total

    def __call__(self, x_real, y_real, generator, discriminator):
        # TODO(synk): torch.cuda.amp.autocast (mixed precision) is not
        # replicated; all compute stays in fp32.
        y_fake = generator(x_real)
        d_on_real = discriminator(y_real)
        d_on_fake = discriminator(y_fake)

        adv_fake_to_one = jnp.float32(0.0)   # adv_loss(d_on_fake, True)
        adv_real_to_one = jnp.float32(0.0)   # adv_loss(d_on_real, True)
        adv_fake_to_zero = jnp.float32(0.0)  # adv_loss(d_on_fake, False)
        fm_total = jnp.float32(0.0)

        for real_feats, fake_feats in zip(d_on_real, d_on_fake):
            # Intermediate layers: feature-matching only.
            for rf, ff in zip(real_feats[:-1], fake_feats[:-1]):
                fm_total = fm_total + l1_loss(jax.lax.stop_gradient(rf), ff)
            # Last layer: one fused pass gives the FM term and all
            # adversarial MSE terms (fake->1, real->1, fake->0) at once.
            # TODO(synk): the .detach() of the real feature inside fm_loss is
            # a backward-only concern and is not replicated in the fused pass
            # (forward values are identical).
            m = fused_last_layer_means(real_feats[-1], fake_feats[-1])
            m_abs, m_r, m_r2, m_f, m_f2 = m[0], m[1], m[2], m[3], m[4]
            fm_total = fm_total + m_abs
            adv_real_to_one = adv_real_to_one + (m_r2 - 2.0 * m_r + 1.0)
            adv_fake_to_one = adv_fake_to_one + (m_f2 - 2.0 * m_f + 1.0)
            adv_fake_to_zero = adv_fake_to_zero + m_f2

        g_loss = (self.lambda0 * adv_fake_to_one
                  + self.lambda1 * fm_total
                  / discriminator.module.n_discriminators)
        d_loss = 0.5 * (adv_real_to_one + adv_fake_to_zero)
        return g_loss, d_loss, jax.lax.stop_gradient(y_fake)


# ----------------------------- reference (pure JAX) -----------------------------

def _ref_adv(preds, tgt):
    return sum(jnp.mean((p[-1] - tgt) ** 2) for p in preds)


def _ref_fm(rp, fp):
    return sum(jnp.mean(jnp.abs(r - f))
               for rs, fs in zip(rp, fp) for r, f in zip(rs, fs))


def _ref_losses(x_real, y_real, generator, discriminator, loss):
    y_fake = generator(x_real)
    d_real = discriminator(y_real)
    d_fake = discriminator(y_fake)
    g = (loss.lambda0 * _ref_adv(d_fake, 1.0)
         + loss.lambda1 * _ref_fm(d_real, d_fake)
         / discriminator.n_discriminators)
    d = 0.5 * (_ref_adv(d_real, 1.0) + _ref_adv(d_fake, 0.0))
    return g, d, d_real, d_fake


# ----------------------------------- main -----------------------------------

if __name__ == "__main__":
    key = jax.random.PRNGKey(0)
    kx, ky, kg, kd = jax.random.split(key, 4)

    B, Cin, Cout, H, W = 2, 4, 3, 16, 16
    x_real = jax.random.normal(kx, (B, Cin, H, W), jnp.float32)
    y_real = jax.random.normal(ky, (B, Cout, H, W), jnp.float32)

    generator = SyntheticGenerator(kg, in_ch=Cin, out_ch=Cout)
    discriminator = SyntheticMultiscaleDiscriminator(kd, in_ch=Cout,
                                                     n_discriminators=2,
                                                     hidden=8)
    loss = Pix2PixHDLoss()

    g_loss, d_loss, y_fake = loss(x_real, y_real, generator, discriminator)
    jax.block_until_ready((g_loss, d_loss, y_fake))

    g_ref, d_ref, d_real_ref, d_fake_ref = _ref_losses(
        x_real, y_real, generator, discriminator, loss)

    assert jnp.allclose(g_loss, g_ref, rtol=1e-4, atol=1e-4), (g_loss, g_ref)
    assert jnp.allclose(d_loss, d_ref, rtol=1e-4, atol=1e-4), (d_loss, d_ref)
    assert y_fake.shape == (B, Cout, H, W)

    # Also exercise the standalone (un-fused) adv / fm kernel paths.
    adv_pal = loss.adv_loss(d_fake_ref, True)
    fm_pal = loss.fm_loss(d_real_ref, d_fake_ref)
    jax.block_until_ready((adv_pal, fm_pal))
    assert jnp.allclose(adv_pal, _ref_adv(d_fake_ref, 1.0),
                        rtol=1e-4, atol=1e-4)
    assert jnp.allclose(fm_pal, _ref_fm(d_real_ref, d_fake_ref),
                        rtol=1e-4, atol=1e-4)

    print("KERNEL_OK")
</pallas_src>

<mosaic_0001>
module attributes {stable_mosaic.version = 11 : i64} {
  func.func @kernel(%arg0: i32, %arg1: i32, %arg2: memref<16x128xf32, #tpu.memory_space<vmem>>, %arg3: memref<16x128xf32, #tpu.memory_space<vmem>>, %arg4: memref<1x1x8x128xf32, #tpu.memory_space<vmem>>, %arg5: memref<1x16x128xf32, #tpu.memory_space<vmem>>) attributes {dimension_semantics = [#tpu.dimension_semantics<parallel>, #tpu.dimension_semantics<arbitrary>], iteration_bounds = array<i64: 2, 1>, scalar_prefetch = 0 : i64, scratch_operands = 1 : i64, tpu.core_type = #tpu.core_type<tc>, window_params = [{transform_indices = @transform_0, window_bounds = array<i64: 16, 128>}, {transform_indices = @transform_1, window_bounds = array<i64: 16, 128>}, {transform_indices = @transform_2, window_bounds = array<i64: 1, 1, 8, 128>}]} {
    %c0_i32 = arith.constant 0 : i32
    %0 = arith.cmpi eq, %arg1, %c0_i32 : i32
    %1 = arith.extui %0 : i1 to i32
    %c0_i32_0 = arith.constant 0 : i32
    %2 = arith.cmpi ne, %1, %c0_i32_0 : i32
    scf.if %2 {
      %cst = arith.constant 0.000000e+00 : f32
      %16 = vector.broadcast %cst : f32 to vector<1x16x128xf32>
      %c0_12 = arith.constant 0 : index
      %c0_13 = arith.constant 0 : index
      %c0_14 = arith.constant 0 : index
      %17 = vector.load %arg5[%c0_12, %c0_13, %c0_14] : memref<1x16x128xf32, #tpu.memory_space<vmem>>, vector<1x16x128xf32>
      tpu.vector_store %arg5[%c0_12, %c0_13, %c0_14], %16 {strides = array<i32>} : memref<1x16x128xf32, #tpu.memory_space<vmem>>, vector<1x16x128xf32>,
    } else {
    }
    %c0 = arith.constant 0 : index
    %c0_1 = arith.constant 0 : index
    %3 = vector.load %arg2[%c0, %c0_1] : memref<16x128xf32, #tpu.memory_space<vmem>>, vector<16x128xf32>
    %c0_2 = arith.constant 0 : index
    %c0_3 = arith.constant 0 : index
    %4 = vector.load %arg3[%c0_2, %c0_3] : memref<16x128xf32, #tpu.memory_space<vmem>>, vector<16x128xf32>
    %5 = arith.subf %3, %4 : vector<16x128xf32>
    %6 = math.absf %5 : vector<16x128xf32>
    %c0_4 = arith.constant 0 : index
    %c0_5 = arith.constant 0 : index
    %c0_6 = arith.constant 0 : index
    %7 = vector.load %arg5[%c0_4, %c0_5, %c0_6] : memref<1x16x128xf32, #tpu.memory_space<vmem>>, vector<1x16x128xf32>
    %8 = vector.shape_cast %7 : vector<1x16x128xf32> to vector<16x128xf32>
    %9 = arith.addf %8, %6 : vector<16x128xf32>
    %c0_7 = arith.constant 0 : index
    %c0_8 = arith.constant 0 : index
    %c0_9 = arith.constant 0 : index
    %10 = vector.load %arg5[%c0_7, %c0_8, %c0_9] : memref<1x16x128xf32, #tpu.memory_space<vmem>>, vector<1x16x128xf32>
    %11 = vector.shape_cast %10 : vector<1x16x128xf32> to vector<16x128xf32>
    %12 = vector.shape_cast %9 : vector<16x128xf32> to vector<1x16x128xf32>
    tpu.vector_store %arg5[%c0_7, %c0_8, %c0_9], %12 {strides = array<i32>} : memref<1x16x128xf32, #tpu.memory_space<vmem>>, vector<1x16x128xf32>,
    %c0_i32_10 = arith.constant 0 : i32
    %13 = arith.cmpi eq, %arg1, %c0_i32_10 : i32
    %14 = arith.extui %13 : i1 to i32
    %c0_i32_11 = arith.constant 0 : i32
    %15 = arith.cmpi ne, %14, %c0_i32_11 : i32
    scf.if %15 {
      %c0_12 = arith.constant 0 : index
      %c0_13 = arith.constant 0 : index
      %c0_14 = arith.constant 0 : index
      %16 = vector.load %arg5[%c0_12, %c0_13, %c0_14] : memref<1x16x128xf32, #tpu.memory_space<vmem>>, vector<1x16x128xf32>
      %17 = vector.shape_cast %16 : vector<1x16x128xf32> to vector<16x128xf32>
      %18 = vector.shape_cast %17 : vector<16x128xf32> to vector<2x8x128xf32>
      %cst = arith.constant dense<0.000000e+00> : vector<8x128xf32>
      %19 = vector.multi_reduction <add>, %18, %cst [0] : vector<2x8x128xf32> to vector<8x128xf32>
      %c0_15 = arith.constant 0 : index
      %c0_16 = arith.constant 0 : index
      %c0_17 = arith.constant 0 : index
      %c0_18 = arith.constant 0 : index
      %20 = vector.load %arg4[%c0_15, %c0_16, %c0_17, %c0_18] : memref<1x1x8x128xf32, #tpu.memory_space<vmem>>, vector<1x1x8x128xf32>
      %21 = vector.shape_cast %20 : vector<1x1x8x128xf32> to vector<8x128xf32>
      %22 = vector.shape_cast %19 : vector<8x128xf32> to vector<1x1x8x128xf32>
      tpu.vector_store %arg4[%c0_15, %c0_16, %c0_17, %c0_18], %22 {strides = array<i32>} : memref<1x1x8x128xf32, #tpu.memory_space<vmem>>, vector<1x1x8x128xf32>,
    } else {
    }
    return
  }
  func.func @transform_0(%arg0: i32, %arg1: i32) -> (i32, i32) {
    %c1_i32 = arith.constant 1 : i32
    %0 = arith.muli %arg0, %c1_i32 : i32
    %1 = arith.addi %0, %arg1 : i32
    %c0_i32 = arith.constant 0 : i32
    %c0_i32_0 = arith.constant 0 : i32
    return %1, %c0_i32 : i32, i32
  }
  func.func @transform_1(%arg0: i32, %arg1: i32) -> (i32, i32) {
    %c1_i32 = arith.constant 1 : i32
    %0 = arith.muli %arg0, %c1_i32 : i32
    %1 = arith.addi %0, %arg1 : i32
    %c0_i32 = arith.constant 0 : i32
    %c0_i32_0 = arith.constant 0 : i32
    return %1, %c0_i32 : i32, i32
  }
  func.func @transform_2(%arg0: i32, %arg1: i32) -> (i32, i32, i32, i32) {
    %c0_i32 = arith.constant 0 : i32
    %c0_i32_0 = arith.constant 0 : i32
    %c0_i32_1 = arith.constant 0 : i32
    %c0_i32_2 = arith.constant 0 : i32
    return %arg0, %c0_i32, %c0_i32_0, %c0_i32_1 : i32, i32, i32, i32
  }
}

</mosaic_0001>

<llo_original>
// kernel: tpu_custom_call.1
$region0: #{tpu_custom_call.1}
  #allocation0 [shape = 'u32[]', space=smem, size = 0x4, offset = 0x4, fixed_abs, tag = 'smem constant byte address 0x4 - core index']
  #allocation1 [shape = 'u32[144,128]{1,0:T(1,128)}', space=vmem, size = 0x12000, scoped, tag = 'internal scratch']
  #allocation2 [shape = 'f32[1,16,128]{2,1,0:T(8,128)}', space=vmem, size = 0x2000, scoped, tag = 'scratch operand']
  %s0 = inlined_call_operand.hbm [shape: f32[32,128], index: 0, kind: input, shape index: {}]
  %s1 = inlined_call_operand.hbm [shape: f32[32,128], index: 1, kind: input, shape index: {}]
  %s2 = inlined_call_operand.hbm [shape: f32[2,1,8,128], index: 2, kind: output, shape index: {}]
  %s3 = sld [smem:[#allocation0]]
  $region57: #{tpu_custom_call.1} parent=0
    _
  %s5 = ssub.s32 1, %s3
  %s6 = scalar_select 0, %s5, %s3
  $region1: #{tpu_custom_call.1} parent=0
    #allocation3 [shape = 'u8[16384]{0}', space=vmem, size = 0x4000, scoped, tag = 'input window, operand 0']
    #allocation4 [shape = 's32[2]{0}', space=sflag, size = 0x8, scoped, tag = 'scoped memory for tpu_custom_call.1']
    #allocation5 [shape = 's32[2]{0}', space=sflag, size = 0x8, scoped, tag = 'scoped memory for tpu_custom_call.1']
    #allocation6 [shape = 'u8[16384]{0}', space=vmem, size = 0x4000, scoped, tag = 'input window, operand 1']
    #allocation7 [shape = 's32[2]{0}', space=sflag, size = 0x8, scoped, tag = 'scoped memory for tpu_custom_call.1']
    #allocation8 [shape = 'u8[8192]{0}', space=vmem, size = 0x2000, scoped, tag = 'output window, operand 0']
    %7 = vsyncpa [#allocation4], 0
    %s8 = scalar_lea.sflag [#allocation4], 1
    %9 = vsyncpa %s8, 0
    %10 = vsyncpa [#allocation7], 0
    %s11 = scalar_lea.sflag [#allocation7], 1
    %12 = vsyncpa %s11, 0
    %13 = vsyncpa [#allocation5], 0
    %s14 = scalar_lea.sflag [#allocation5], 1
    %15 = vsyncpa %s14, 0
    loop: start=0, step=1, limit=4
    $region2: #{tpu_custom_call.1} parent=1 // loop_pre_header
      _
    $region3: #{tpu_custom_call.1} parent=1 // loop_header
      %s17 = sphi 0, %s21
      %p18 = scmp.ge.s32.totalorder %s17, 4
      %s24 = sphi 0, %s36
      %s25 = sphi 0, %s32
      %s26 = sphi 0, %s24
      %s27 = sphi 0, %s25
      %s28 = sphi 0, %s26
      %s29 = sphi 0, %s27
      %s41 = sphi 0, %s43
      %s44 = sphi 0, %s41
      %s45 = sphi 0, %s44
      %s61 = sphi 0, %s45
      %s69 = sphi 0, %s71
      %s72 = sphi 0, %s69
      %s73 = sphi 0, %s72
      %s89 = sphi 0, %s73
      %s95 = sphi 0, %s97
      %s98 = sphi 0, %s95
      %s99 = sphi 0, %s98
      %s115 = sphi 0, %s99
    $region4: #{tpu_custom_call.1} parent=1 // loop_header_branch
      %20 = sbr.rel (%p18) target = $region8
    $region5: #{tpu_custom_call.1} parent=1 // loop_body
      %s22 = ssub.s32 %s17, 1
      %s23 = ssub.s32 %s17, 2
      %s30 = sadd.s32 1, %s25
      %p31 = scmp.ge.s32.totalorder %s30, 1
      %s32 = scalar_select %p31, 0, %s30
      %s33 = sadd.s32 1, %s24
      %s34 = scalar_select %p31, %s33, %s24
      %p35 = scmp.ge.s32.totalorder %s34, 2
      %s36 = scalar_select %p35, 0, %s34
      %s37 = sadd.s32 %s24, %s25
      %s38 = sadd.s32 %s36, %s32
      %s39 = ssub.s32 %s37, %s38
      %p40 = scmp.eq.s32.totalorder %s39, 0
      %s42 = sadd.s32 %s41, 1
      %s43 = scalar_select %p40, %s41, %s42
      %p46 = pneg %p40
      %p47 = scmp.eq.s32.totalorder %s17, 1
      %p48 = por %p46, %p47
      %p49 = scmp.ne.s32.totalorder %s41, %s44
      %p50 = scmp.eq.s32.totalorder %s17, 0
      %p51 = por %p49, %p50
      %p52 = scmp.ne.s32.totalorder %s41, %s44
      %p53 = scmp.eq.s32.totalorder %s22, 1
      %p54 = por %p52, %p53
      %p55 = scmp.ne.s32.totalorder %s44, %s45
      %p56 = scmp.eq.s32.totalorder %s22, 0
      %p57 = por %p55, %p56
      %p58 = scmp.ne.s32.totalorder %s44, %s45
      %p59 = scmp.eq.s32.totalorder %s23, 1
      %p60 = por %p58, %p59
      %p62 = scmp.ne.s32.totalorder %s45, %s61
      %p63 = scmp.eq.s32.totalorder %s23, 0
      %p64 = por %p62, %p63
      %s65 = sadd.s32 %s24, %s25
      %s66 = sadd.s32 %s36, %s32
      %s67 = ssub.s32 %s65, %s66
      %p68 = scmp.eq.s32.totalorder %s67, 0
      %s70 = sadd.s32 %s69, 1
      %s71 = scalar_select %p68, %s69, %s70
      %p74 = pneg %p68
      %p75 = scmp.eq.s32.totalorder %s17, 1
      %p76 = por %p74, %p75
      %p77 = scmp.ne.s32.totalorder %s69, %s72
      %p78 = scmp.eq.s32.totalorder %s17, 0
      %p79 = por %p77, %p78
      %p80 = scmp.ne.s32.totalorder %s69, %s72
      %p81 = scmp.eq.s32.totalorder %s22, 1
      %p82 = por %p80, %p81
      %p83 = scmp.ne.s32.totalorder %s72, %s73
      %p84 = scmp.eq.s32.totalorder %s22, 0
      %p85 = por %p83, %p84
      %p86 = scmp.ne.s32.totalorder %s72, %s73
      %p87 = scmp.eq.s32.totalorder %s23, 1
      %p88 = por %p86, %p87
      %p90 = scmp.ne.s32.totalorder %s73, %s89
      %p91 = scmp.eq.s32.totalorder %s23, 0
      %p92 = por %p90, %p91
      %s93 = ssub.s32 %s24, %s36
      %p94 = scmp.eq.s32.totalorder %s93, 0
      %s96 = sadd.s32 %s95, 1
      %s97 = scalar_select %p94, %s95, %s96
      %p100 = pneg %p94
      %p101 = scmp.eq.s32.totalorder %s17, 1
      %p102 = por %p100, %p101
      %p103 = scmp.ne.s32.totalorder %s95, %s98
      %p104 = scmp.eq.s32.totalorder %s17, 0
      %p105 = por %p103, %p104
      %p106 = scmp.ne.s32.totalorder %s95, %s98
      %p107 = scmp.eq.s32.totalorder %s22, 1
      %p108 = por %p106, %p107
      %p109 = scmp.ne.s32.totalorder %s98, %s99
      %p110 = scmp.eq.s32.totalorder %s22, 0
      %p111 = por %p109, %p110
      %p112 = scmp.ne.s32.totalorder %s98, %s99
      %p113 = scmp.eq.s32.totalorder %s23, 1
      %p114 = por %p112, %p113
      %p116 = scmp.ne.s32.totalorder %s99, %s115
      %p117 = scmp.eq.s32.totalorder %s23, 0
      %p118 = por %p116, %p117
      %p119 = scmp.le.s32.totalorder 1, %s17
      %p120 = scmp.lt.s32.totalorder %s17, 3
      %p121 = pnand %p119, %p120
      %p122 = pneg %p121
      // Predicated region
      $region9: #{tpu_custom_call.1} parent=5 // pred_check
        _
      $region10: #{tpu_custom_call.1} parent=5 // pred_check_branch
        %124 = sbr.rel (%p121) target = $region12
      $region11: #{tpu_custom_call.1} parent=5 // pred_region
        %s125 = ssub.s32 %s17, 1
      $region12: #{tpu_custom_call.1} parent=5 // pred_fallthru
        _
      %p126 = scmp.lt.s32.totalorder %s17, 2
      // Predicated region
      $region13: #{tpu_custom_call.1} parent=5 // pred_check
        %p127 = pneg %p126
      $region14: #{tpu_custom_call.1} parent=5 // pred_check_branch
        %129 = sbr.rel (%p127) target = $region16
      $region15: #{tpu_custom_call.1} parent=5 // pred_region
        // Predicated region
        $region17: #{tpu_custom_call.1} parent=15 // pred_check
          %p130 = pneg %p51
        $region18: #{tpu_custom_call.1} parent=15 // pred_check_branch
          %132 = sbr.rel (%p130) target = $region20
        $region19: #{tpu_custom_call.1} parent=15 // pred_region
          %s133 = sand.u32 %s41, 1
          %s134 = scalar_lea.sflag [#allocation4], %s133
          %s135 = sand.u32 %s41, 1
          %s136 = smul.addr %s135, 16
          %s137 = scalar_lea.vmem [#allocation3], %s136
          %s138 = sadd.s32 %s24, %s25
          %s139 = smul.u32 2, %s138
          %s141 = ssub.s32 256, 256
          %142 = vsyncadd %s134, %s141
          %s143 = smul.addr %s139, 128
          %s144 = scalar_lea.hbm %s0, %s143
          %s145 = sshll.u32 %s137, 4
          %s146 = int_to_ptr.vmem [resolvable:$true] %s145
          %151 = dma.hbm_to_vmem [thread:$0]  %s144, 256, %s146, %s134, 128, 128, 8
        $region20: #{tpu_custom_call.1} parent=15 // pred_fallthru
          _
        // Predicated region
        $region21: #{tpu_custom_call.1} parent=15 // pred_check
          %p152 = pneg %p79
        $region22: #{tpu_custom_call.1} parent=15 // pred_check_branch
          %154 = sbr.rel (%p152) target = $region24
        $region23: #{tpu_custom_call.1} parent=15 // pred_region
          %s155 = sand.u32 %s69, 1
          %s156 = scalar_lea.sflag [#allocation7], %s155
          %s157 = sand.u32 %s69, 1
          %s158 = smul.addr %s157, 16
          %s159 = scalar_lea.vmem [#allocation6], %s158
          %s160 = sadd.s32 %s24, %s25
          %s161 = smul.u32 2, %s160
          %s163 = ssub.s32 256, 256
          %164 = vsyncadd %s156, %s163
          %s165 = smul.addr %s161, 128
          %s166 = scalar_lea.hbm %s1, %s165
          %s167 = sshll.u32 %s159, 4
          %s168 = int_to_ptr.vmem [resolvable:$true] %s167
          %173 = dma.hbm_to_vmem [thread:$0]  %s166, 256, %s168, %s156, 128, 128, 8
        $region24: #{tpu_custom_call.1} parent=15 // pred_fallthru
          _
      $region16: #{tpu_custom_call.1} parent=5 // pred_fallthru
        _
      %p174 = scmp.le.s32.totalorder 1, %s17
      %p175 = scmp.lt.s32.totalorder %s17, 3
      %p176 = pnand %p174, %p175
      %p177 = pneg %p176
      // Predicated region
      $region25: #{tpu_custom_call.1} parent=5 // pred_check
        _
      $region26: #{tpu_custom_call.1} parent=5 // pred_check_branch
        %179 = sbr.rel (%p176) target = $region28
      $region27: #{tpu_custom_call.1} parent=5 // pred_region
        %s180 = ssub.s32 %s17, 1
        %s181 = sand.u32 %s44, 1
        %s182 = scalar_lea.sflag [#allocation4], %s181
        %s183 = sand.u32 %s44, 1
        %s184 = smul.addr %s183, 16
        %s185 = scalar_lea.vmem [#allocation3], %s184
        // Predicated region
        $region29: #{tpu_custom_call.1} parent=27 // pred_check
          %p186 = pneg %p57
        $region30: #{tpu_custom_call.1} parent=27 // pred_check_branch
          %188 = sbr.rel (%p186) target = $region32
        $region31: #{tpu_custom_call.1} parent=27 // pred_region
          %189 = dma.done %s182, 256
        $region32: #{tpu_custom_call.1} parent=27 // pred_fallthru
          _
        %s190 = sand.u32 %s72, 1
        %s191 = scalar_lea.sflag [#allocation7], %s190
        %s192 = sand.u32 %s72, 1
        %s193 = smul.addr %s192, 16
        %s194 = scalar_lea.vmem [#allocation6], %s193
        // Predicated region
        $region33: #{tpu_custom_call.1} parent=27 // pred_check
          %p195 = pneg %p85
        $region34: #{tpu_custom_call.1} parent=27 // pred_check_branch
          %197 = sbr.rel (%p195) target = $region36
        $region35: #{tpu_custom_call.1} parent=27 // pred_region
          %198 = dma.done %s191, 256
        $region36: #{tpu_custom_call.1} parent=27 // pred_fallthru
          _
        %s199 = sand.u32 %s44, 1
        %s200 = scalar_lea.sflag [#allocation4], %s199
        %s201 = sand.u32 %s44, 1
        %s202 = smul.addr %s201, 16
        %s203 = scalar_lea.vmem [#allocation3], %s202
        %p204 = pneg %p57
        %p205 = pneg %p54
        %s206 = sand.u32 %s72, 1
        %s207 = scalar_lea.sflag [#allocation7], %s206
        %s208 = sand.u32 %s72, 1
        %s209 = smul.addr %s208, 16
        %s210 = scalar_lea.vmem [#allocation6], %s209
        %p211 = pneg %p85
        %p212 = pneg %p82
        %p213 = pneg %p111
        %p214 = pneg %p108
        %s215 = sand.u32 %s98, 1
        %s216 = scalar_lea.sflag [#allocation5], %s215
        %s217 = sand.u32 %s98, 1
        %s218 = smul.addr %s217, 8
        %s219 = scalar_lea.vmem [#allocation8], %s218
        %s220 = sadd.s32 %s26, %s27
        %s221 = smul.u32 2, %s220
        %s222 = sadd.s32 %s26, %s27
        %s223 = smul.u32 2, %s222
        %p224 = scmp.eq.s32.totalorder %s27, 0
        // Predicated region
        $region37: #{tpu_custom_call.1} parent=27 // pred_check
          %p225 = pneg %p224
        $region38: #{tpu_custom_call.1} parent=27 // pred_check_branch
          %227 = sbr.rel (%p225) target = $region40
        $region39: #{tpu_custom_call.1} parent=27 // pred_region
          %228 = vst [vmem:[#allocation2] sm:$0xff] 0.0
          %229 = vst [vmem:[#allocation2 + $0x8] sm:$0xff] 0.0
        $region40: #{tpu_custom_call.1} parent=27 // pred_fallthru
          _
        %v230 = vld [vmem:[%s185] sm:$0xff]
        %v231 = vld [vmem:[%s185 + $0x8] sm:$0xff]
        %v232 = vld [vmem:[%s194] sm:$0xff]
        %v233 = vld [vmem:[%s194 + $0x8] sm:$0xff]
        %v234 = vsub.f32 %v230, %v232
        %v235 = vsub.f32 %v231, %v233
        %v236 = vand.u32 2147483647, %v234
        %v237 = vand.u32 2147483647, %v235
        %v238 = vld [vmem:[#allocation2] sm:$0xff]
        %v239 = vld [vmem:[#allocation2 + $0x8] sm:$0xff]
        %v240 = vadd.f32 %v238, %v236
        %v241 = vadd.f32 %v239, %v237
        %242 = vst [vmem:[#allocation2] sm:$0xff] %v240
        %243 = vst [vmem:[#allocation2 + $0x8] sm:$0xff] %v241
        // Predicated region
        $region41: #{tpu_custom_call.1} parent=27 // pred_check
          %p244 = pneg %p224
        $region42: #{tpu_custom_call.1} parent=27 // pred_check_branch
          %246 = sbr.rel (%p244) target = $region44
        $region43: #{tpu_custom_call.1} parent=27 // pred_region
          %v247 = vld [vmem:[#allocation2] sm:$0xff]
          %v248 = vld [vmem:[#allocation2 + $0x8] sm:$0xff]
          %v249 = vadd.f32 %v247, %v248
          %250 = vst [vmem:[%s219] sm:$0xff] %v249
        $region44: #{tpu_custom_call.1} parent=27 // pred_fallthru
          _
        %s251 = sand.u32 %s98, 1
        %s252 = scalar_lea.sflag [#allocation5], %s251
        %s253 = sand.u32 %s98, 1
        %s254 = smul.addr %s253, 8
        %s255 = scalar_lea.vmem [#allocation8], %s254
        // Predicated region
        $region45: #{tpu_custom_call.1} parent=27 // pred_check
          %p256 = pneg %p108
        $region46: #{tpu_custom_call.1} parent=27 // pred_check_branch
          %258 = sbr.rel (%p256) target = $region48
        $region47: #{tpu_custom_call.1} parent=27 // pred_region
          %s260 = ssub.s32 128, 128
          %261 = vsyncadd %s252, %s260
          %s262 = smul.addr %s26, 128
          %s263 = scalar_lea.hbm %s2, %s262
          %s265 = sshll.u32 %s255, 4
          %s266 = int_to_ptr.vmem [resolvable:$true] %s265
          %268 = dma.vmem_to_hbm [thread:$0]  %s266, 128, %s263, %s252
        $region48: #{tpu_custom_call.1} parent=27 // pred_fallthru
          _
      $region28: #{tpu_custom_call.1} parent=5 // pred_fallthru
        _
      %p269 = scmp.le.s32.totalorder 2, %s17
      // Predicated region
      $region49: #{tpu_custom_call.1} parent=5 // pred_check
        %p270 = pneg %p269
      $region50: #{tpu_custom_call.1} parent=5 // pred_check_branch
        %272 = sbr.rel (%p270) target = $region52
      $region51: #{tpu_custom_call.1} parent=5 // pred_region
        %s273 = ssub.s32 %s17, 2
        // Predicated region
        $region53: #{tpu_custom_call.1} parent=51 // pred_check
          %p274 = pneg %p114
        $region54: #{tpu_custom_call.1} parent=51 // pred_check_branch
          %276 = sbr.rel (%p274) target = $region56
        $region55: #{tpu_custom_call.1} parent=51 // pred_region
          %s277 = sand.u32 %s99, 1
          %s278 = scalar_lea.sflag [#allocation5], %s277
          %s279 = sand.u32 %s99, 1
          %s280 = smul.addr %s279, 8
          %s281 = scalar_lea.vmem [#allocation8], %s280
          %282 = dma.done %s278, 128
        $region56: #{tpu_custom_call.1} parent=51 // pred_fallthru
          _
      $region52: #{tpu_custom_call.1} parent=5 // pred_fallthru
        _
    $region6: #{tpu_custom_call.1} parent=1 // loop_footer
      %s21 = sadd.s32 1, %s17
    $region7: #{tpu_custom_call.1} parent=1 // loop_footer_branch
      %16 = sbr.rel target = $region3
    $region8: #{tpu_custom_call.1} parent=1 // loop_exit
      _
    %283 = vsyncpa [#allocation4], 1
    %s284 = scalar_lea.sflag [#allocation4], 1
    %285 = vsyncpa %s284, 1
    %286 = vsyncpa [#allocation7], 1
    %s287 = scalar_lea.sflag [#allocation7], 1
    %288 = vsyncpa %s287, 1
    %289 = vsyncpa [#allocation5], 1
    %s290 = scalar_lea.sflag [#allocation5], 1
    %291 = vsyncpa %s290, 1

</llo_original>
